<compile_context>
chip_gen: v7x
topology: tpu7x:2x2x1
jax: 0.10.0
libtpu: 0.0.40
codegen_flags: <defaults>
</compile_context>

<pallas_src>
import functools

import numpy as np
import jax
import jax.numpy as jnp
from jax.experimental import pallas as pl
from jax.experimental.pallas import tpu as pltpu


def _round_up(x, m):
    return ((x + m - 1) // m) * m


def _pafa_partial_kernel(labels_ref, feat_ref, gs_ref, ss_ref, *,
                         n_samples, tile_n, grid_half, p_pad, needs_mask):
    c = pl.program_id(0)            # parallel split index (per-core partials)
    i = pl.program_id(1)            # reduction step within this core's range

    @pl.when(i == 0)
    def _init():
        gs_ref[...] = jnp.zeros_like(gs_ref)
        ss_ref[...] = jnp.zeros_like(ss_ref)

    lab = labels_ref[...]           # (1, tile_n) int32; -1 == padded sample slot
    f = feat_ref[...]               # (tile_n, D) caller dtype (f32 by default)

    if needs_mask:
        # Zero out rows past N before ANY use: a partial / phantom tile's
        # unfilled VMEM rows may contain garbage (possibly NaN) and 0*NaN would
        # otherwise leak NaN through the MXU dot and the squared sum.
        tile_idx = c * grid_half + i
        rows_left = n_samples - tile_idx * tile_n          # traced scalar
        row_ids = jax.lax.broadcasted_iota(jnp.int32, f.shape, 0)
        f = jnp.where(row_ids < rows_left, f, jnp.zeros_like(f))

    # One-hot patient membership rebuilt in-kernel (no dense (P, N) HBM traffic).
    patient_rows = jax.lax.broadcasted_iota(jnp.int32, (p_pad, tile_n), 0)
    onehot = (lab == patient_rows).astype(f.dtype)

    # MXU: per-patient feature sums, f32 accumulation directly in the resident
    # per-core output block.
    gs_ref[...] += jnp.dot(onehot, f, preferred_element_type=jnp.float32)

    # Partial sum ||f||^2 kept as a (1, D) f32 row; the cross-lane reduce is
    # paid only once in the tiny plain-JAX finalize.
    f32 = f.astype(jnp.float32)
    ss_ref[...] += jnp.sum(f32 * f32, axis=0, keepdims=True)


def pafa_loss_from_labels(features, labels, inv_counts, num_patients,
                          eps=1e-6, lambda_pcsl=0.1, lambda_gpal=0.1,
                          tile_n=None):
    """Jit-friendly core.

    features:   (N, D) array (f32 or bf16).
    labels:     (N,) int32, values in [0, num_patients) (patient row index).
    inv_counts: (P_pad, 1) f32, 1/n_p for real patient rows, 0 for padded rows.
    num_patients: true (unpadded) patient count, static.
    """
    features = jnp.asarray(features)
    N, D = features.shape
    labels = jnp.asarray(labels).astype(jnp.int32).reshape(N)
    inv_counts = jnp.asarray(inv_counts, jnp.float32)
    P_pad = int(inv_counts.shape[0])

    if tile_n is None:
        # Size tiles by bytes (~12 MiB of features per block): per-step overhead
        # (~0.35 us) becomes negligible against the block DMA time, and the
        # double-buffered pair stays well under the 48 MiB VMEM limit below
        # (safe on v7x's 64 MiB physical; v5e/v6e have 128 MiB of headroom).
        per_row = D * features.dtype.itemsize
        tile_n = max(128, ((12 << 20) // per_row) // 128 * 128)
        tile_n = min(tile_n, _round_up(N, 128))
    assert tile_n % 128 == 0, "tile_n must be a multiple of 128"

    grid_n = -(-N // tile_n)                   # number of real feature tiles
    n_par = 2 if grid_n >= 2 else 1            # leading "parallel" axis (2 TCs on v7x)
    grid_half = -(-grid_n // n_par)
    n_lab = n_par * grid_half * tile_n
    needs_mask = (N % tile_n != 0) or (n_par * grid_half != grid_n)
    feat_clamp = max(grid_n - 1, 0)            # clamp phantom tiles into bounds

    # Tiny label row padded with -1 (N*4 bytes of "membership" traffic; no
    # dense (P, N) mask and no padded copy of the features themselves).
    labels_row = jnp.full((1, n_lab), -1, jnp.int32).at[0, :N].set(labels)

    kernel = functools.partial(
        _pafa_partial_kernel,
        n_samples=N, tile_n=tile_n, grid_half=grid_half,
        p_pad=P_pad, needs_mask=needs_mask)

    cost = pl.CostEstimate(
        flops=2 * P_pad * n_lab * D + 3 * n_lab * D,
        transcendentals=0,
        bytes_accessed=N * D * features.dtype.itemsize + n_lab * 4
                       + n_par * (P_pad + 1) * D * 4,
    )

    gs_parts, ss_parts = pl.pallas_call(
        kernel,
        out_shape=(
            jax.ShapeDtypeStruct((n_par, P_pad, D), jnp.float32),   # group sums
            jax.ShapeDtypeStruct((n_par, 1, D), jnp.float32),       # sum ||f||^2
        ),
        grid=(n_par, grid_half),
        in_specs=[
            pl.BlockSpec((1, tile_n), lambda c, i: (0, c * grid_half + i)),
            # NOTE: if D is not a multiple of 128, lane utilization is D/128
            # (efficiency cliff) -- pad the feature dim upstream if possible.
            pl.BlockSpec((tile_n, D),
                         lambda c, i: (jnp.minimum(c * grid_half + i, feat_clamp), 0)),
        ],
        out_specs=(
            pl.BlockSpec((None, P_pad, D), lambda c, i: (c, 0, 0)),
            pl.BlockSpec((None, 1, D), lambda c, i: (c, 0, 0)),
        ),
        compiler_params=pltpu.CompilerParams(
            dimension_semantics=("parallel", "arbitrary"),
            vmem_limit_bytes=48 * 1024 * 1024,
        ),
        cost_estimate=cost,
    )(labels_row, features)

    # ----- tiny O(P*D) closed-form finalize in plain JAX -----
    gs = jnp.sum(gs_parts, axis=0)                            # (P_pad, D)
    sumsq_f = jnp.sum(ss_parts)                               # sum ||f||^2
    gs_sq = jnp.sum(gs * gs, axis=1, keepdims=True)           # (P_pad, 1)
    within = sumsq_f - jnp.sum(gs_sq * inv_counts)            # sum_p n_p ||c_p||^2
    cent_sq = gs_sq * inv_counts * inv_counts                 # ||c_p||^2 (0 on pad rows)
    S = jnp.sum(cent_sq)                                      # sum_p ||c_p||^2
    s_vec = jnp.sum(gs * inv_counts, axis=0)                  # sum_p c_p, shape (D,)
    s_sq = jnp.sum(s_vec * s_vec)                             # ||sum_p c_p||^2

    pn = jnp.float32(num_patients)
    between = pn * S - s_sq                                   # sum_{i<j} ||c_i - c_j||^2
    loss_pcsl = within / (between + eps)
    loss_gpal = S / pn - s_sq / (pn * pn)                     # mean_p ||c_p - g||^2
    return lambda_pcsl * loss_pcsl + lambda_gpal * loss_gpal


def pafa_loss(features, patient_ids, eps=1e-6, lambda_pcsl=0.1,
              lambda_gpal=0.1, tile_n=None):
    # NOTE: mirrors the reference's torch.unique, which requires concrete
    # patient_ids on the host.  For hot training loops, hoist this per-batch
    # preprocessing (labels / inv_counts) out and call pafa_loss_from_labels
    # directly -- that path is jit-friendly and avoids the host sync here.
    pid_np = np.asarray(patient_ids)
    unique_ids, counts = np.unique(pid_np, return_counts=True)
    P = int(unique_ids.shape[0])
    if P <= 1:
        # reference returns a zero tensor when <=1 unique patient
        return jnp.float32(0.0)

    features = jnp.asarray(features)
    labels_np = np.searchsorted(unique_ids, pid_np).astype(np.int32)

    # f32 features -> 8-row sublane padding is enough; bf16 packs 16 sublanes.
    sub = 8 if features.dtype.itemsize == 4 else 16
    P_pad = max(sub, _round_up(P, sub))
    inv_counts_np = np.zeros((P_pad, 1), np.float32)
    inv_counts_np[:P, 0] = 1.0 / counts.astype(np.float64)    # 0 on padded rows

    return pafa_loss_from_labels(features, labels_np, inv_counts_np, P,
                                 eps=eps, lambda_pcsl=lambda_pcsl,
                                 lambda_gpal=lambda_gpal, tile_n=tile_n)


def _reference(features, patient_ids, eps=1e-6, lambda_pcsl=0.1,
               lambda_gpal=0.1):
    # straight numpy (float64) port of the PyTorch reference, for verification
    f = np.asarray(features, np.float64)
    pid = np.asarray(patient_ids)
    uids = np.unique(pid)
    if uids.size <= 1:
        return 0.0
    within = 0.0
    cents = []
    for u in uids:
        fp = f[pid == u]
        c = fp.mean(axis=0)
        cents.append(c)
        within += np.sum((fp - c) ** 2)
    cents = np.stack(cents, 0)
    between = 0.0
    for i in range(cents.shape[0]):
        for j in range(i + 1, cents.shape[0]):
            between += np.sum((cents[i] - cents[j]) ** 2)
    loss_pcsl = within / (between + eps)
    g = cents.mean(axis=0)
    loss_gpal = np.mean(np.sum((cents - g) ** 2, axis=1))
    return lambda_pcsl * loss_pcsl + lambda_gpal * loss_gpal


if __name__ == "__main__":
    key = jax.random.PRNGKey(0)
    # Small but non-trivial: 300 samples with tile_n=128 -> 3 real tiles
    # (ragged last tile) split 2-ways (one phantom tile exercises the clamp +
    # mask path), feature dim 128 (lane-dense), 5 patients with non-contiguous
    # ids (-> padded to 8 one-hot rows).
    N, D, P = 300, 128, 5
    features = jax.random.normal(key, (N, D), dtype=jnp.float32)
    pid_values = np.array([17, 3, 42, 8, 23], dtype=np.int64)
    patient_ids = pid_values[np.arange(N) % P]

    loss = pafa_loss(features, patient_ids, tile_n=128)
    loss = jax.block_until_ready(loss)

    ref = _reference(np.asarray(features), patient_ids)
    assert np.isfinite(float(loss)), float(loss)
    assert np.allclose(float(loss), ref, rtol=1e-3, atol=1e-5), (float(loss), ref)
    print("KERNEL_OK")
</pallas_src>

<mosaic_0001>
module attributes {stable_mosaic.version = 11 : i64} {
  func.func @_pafa_partial_kernel(%arg0: i32, %arg1: i32, %arg2: memref<1x128xi32, #tpu.memory_space<vmem>>, %arg3: memref<128x128xf32, #tpu.memory_space<vmem>>, %arg4: memref<1x8x128xf32, #tpu.memory_space<vmem>>, %arg5: memref<1x1x128xf32, #tpu.memory_space<vmem>>) attributes {dimension_semantics = [#tpu.dimension_semantics<parallel>, #tpu.dimension_semantics<arbitrary>], iteration_bounds = array<i64: 2, 2>, scalar_prefetch = 0 : i64, scratch_operands = 0 : i64, tpu.core_type = #tpu.core_type<tc>, window_params = [{transform_indices = @transform_0, window_bounds = array<i64: 1, 128>}, {transform_indices = @transform_1, window_bounds = array<i64: 128, 128>}, {transform_indices = @transform_2, window_bounds = array<i64: 1, 8, 128>}, {transform_indices = @transform_3, window_bounds = array<i64: 1, 1, 128>}]} {
    %c0_i32 = arith.constant 0 : i32
    %0 = arith.cmpi eq, %arg1, %c0_i32 : i32
    %1 = arith.extui %0 : i1 to i32
    %c0_i32_0 = arith.constant 0 : i32
    %2 = arith.cmpi ne, %1, %c0_i32_0 : i32
    scf.if %2 {
      %cst_18 = arith.constant 0.000000e+00 : f32
      %35 = vector.broadcast %cst_18 : f32 to vector<8x128xf32>
      %c0_19 = arith.constant 0 : index
      %c0_20 = arith.constant 0 : index
      %c0_21 = arith.constant 0 : index
      %36 = vector.load %arg4[%c0_19, %c0_20, %c0_21] : memref<1x8x128xf32, #tpu.memory_space<vmem>>, vector<1x8x128xf32>
      %37 = vector.shape_cast %36 : vector<1x8x128xf32> to vector<8x128xf32>
      %38 = vector.shape_cast %35 : vector<8x128xf32> to vector<1x8x128xf32>
      tpu.vector_store %arg4[%c0_19, %c0_20, %c0_21], %38 {strides = array<i32>} : memref<1x8x128xf32, #tpu.memory_space<vmem>>, vector<1x8x128xf32>,
      %cst_22 = arith.constant 0.000000e+00 : f32
      %39 = vector.broadcast %cst_22 : f32 to vector<1x128xf32>
      %c0_23 = arith.constant 0 : index
      %c0_24 = arith.constant 0 : index
      %c0_25 = arith.constant 0 : index
      %40 = vector.load %arg5[%c0_23, %c0_24, %c0_25] : memref<1x1x128xf32, #tpu.memory_space<vmem>>, vector<1x1x128xf32>
      %41 = vector.shape_cast %40 : vector<1x1x128xf32> to vector<1x128xf32>
      %42 = vector.shape_cast %39 : vector<1x128xf32> to vector<1x1x128xf32>
      tpu.vector_store %arg5[%c0_23, %c0_24, %c0_25], %42 {strides = array<i32>} : memref<1x1x128xf32, #tpu.memory_space<vmem>>, vector<1x1x128xf32>,
    } else {
    }
    %c0 = arith.constant 0 : index
    %c0_1 = arith.constant 0 : index
    %3 = vector.load %arg2[%c0, %c0_1] : memref<1x128xi32, #tpu.memory_space<vmem>>, vector<1x128xi32>
    %c0_2 = arith.constant 0 : index
    %c0_3 = arith.constant 0 : index
    %4 = vector.load %arg3[%c0_2, %c0_3] : memref<128x128xf32, #tpu.memory_space<vmem>>, vector<128x128xf32>
    %c2_i32 = arith.constant 2 : i32
    %5 = arith.muli %arg0, %c2_i32 : i32
    %6 = arith.addi %5, %arg1 : i32
    %c128_i32 = arith.constant 128 : i32
    %7 = arith.muli %6, %c128_i32 : i32
    %c300_i32 = arith.constant 300 : i32
    %8 = arith.subi %c300_i32, %7 : i32
    %9 = tpu.iota {dimensions = array<i32: 0>} : vector<128x128xi32>
    %10 = vector.broadcast %8 : i32 to vector<128x128xi32>
    %11 = arith.cmpi slt, %9, %10 : vector<128x128xi32>
    %cst = arith.constant 0.000000e+00 : f32
    %12 = vector.broadcast %cst : f32 to vector<128x128xf32>
    %13 = arith.select %11, %4, %12 : vector<128x128xi1>, vector<128x128xf32>
    %14 = tpu.iota {dimensions = array<i32: 0>} : vector<8x128xi32>
    %15 = vector.broadcast %3 : vector<1x128xi32> to vector<8x128xi32>
    %16 = arith.cmpi eq, %15, %14 : vector<8x128xi32>
    %17 = arith.extui %16 : vector<8x128xi1> to vector<8x128xi32>
    %18 = arith.sitofp %17 : vector<8x128xi32> to vector<8x128xf32>
    %c0_4 = arith.constant 0 : index
    %c0_5 = arith.constant 0 : index
    %c0_6 = arith.constant 0 : index
    %19 = vector.load %arg4[%c0_4, %c0_5, %c0_6] : memref<1x8x128xf32, #tpu.memory_space<vmem>>, vector<1x8x128xf32>
    %20 = vector.shape_cast %19 : vector<1x8x128xf32> to vector<8x128xf32>
    %cst_7 = arith.constant dense<0.000000e+00> : vector<8x128xf32>
    %21 = tpu.matmul %18, %13, %cst_7 {dimension_numbers = #tpu.dot_dimension_numbers<[1], [0], [0], [1], [0, 0, 1, 1], [], []>} : vector<8x128xf32>, vector<128x128xf32>, vector<8x128xf32> -> vector<8x128xf32>
    %22 = arith.addf %20, %21 : vector<8x128xf32>
    %c0_8 = arith.constant 0 : index
    %c0_9 = arith.constant 0 : index
    %c0_10 = arith.constant 0 : index
    %23 = vector.load %arg4[%c0_8, %c0_9, %c0_10] : memref<1x8x128xf32, #tpu.memory_space<vmem>>, vector<1x8x128xf32>
    %24 = vector.shape_cast %23 : vector<1x8x128xf32> to vector<8x128xf32>
    %25 = vector.shape_cast %22 : vector<8x128xf32> to vector<1x8x128xf32>
    tpu.vector_store %arg4[%c0_8, %c0_9, %c0_10], %25 {strides = array<i32>} : memref<1x8x128xf32, #tpu.memory_space<vmem>>, vector<1x8x128xf32>,
    %c0_11 = arith.constant 0 : index
    %c0_12 = arith.constant 0 : index
    %c0_13 = arith.constant 0 : index
    %26 = vector.load %arg5[%c0_11, %c0_12, %c0_13] : memref<1x1x128xf32, #tpu.memory_space<vmem>>, vector<1x1x128xf32>
    %27 = vector.shape_cast %26 : vector<1x1x128xf32> to vector<1x128xf32>
    %28 = arith.mulf %13, %13 : vector<128x128xf32>
    %cst_14 = arith.constant dense<0.000000e+00> : vector<128xf32>
    %29 = vector.multi_reduction <add>, %28, %cst_14 [0] : vector<128x128xf32> to vector<128xf32>
    %30 = vector.shape_cast %29 : vector<128xf32> to vector<1x128xf32>
    %31 = arith.addf %27, %30 : vector<1x128xf32>
    %c0_15 = arith.constant 0 : index
    %c0_16 = arith.constant 0 : index
    %c0_17 = arith.constant 0 : index
    %32 = vector.load %arg5[%c0_15, %c0_16, %c0_17] : memref<1x1x128xf32, #tpu.memory_space<vmem>>, vector<1x1x128xf32>
    %33 = vector.shape_cast %32 : vector<1x1x128xf32> to vector<1x128xf32>
    %34 = vector.shape_cast %31 : vector<1x128xf32> to vector<1x1x128xf32>
    tpu.vector_store %arg5[%c0_15, %c0_16, %c0_17], %34 {strides = array<i32>} : memref<1x1x128xf32, #tpu.memory_space<vmem>>, vector<1x1x128xf32>,
    return
  }
  func.func @transform_0(%arg0: i32, %arg1: i32) -> (i32, i32) {
    %c2_i32 = arith.constant 2 : i32
    %0 = arith.muli %arg0, %c2_i32 : i32
    %1 = arith.addi %0, %arg1 : i32
    %c0_i32 = arith.constant 0 : i32
    %c0_i32_0 = arith.constant 0 : i32
    return %c0_i32, %1 : i32, i32
  }
  func.func @transform_1(%arg0: i32, %arg1: i32) -> (i32, i32) {
    %c2_i32 = arith.constant 2 : i32
    %0 = arith.muli %arg0, %c2_i32 : i32
    %1 = arith.addi %0, %arg1 : i32
    %c2_i32_0 = arith.constant 2 : i32
    %2 = arith.minsi %1, %c2_i32_0 : i32
    %c0_i32 = arith.constant 0 : i32
    %c0_i32_1 = arith.constant 0 : i32
    return %2, %c0_i32 : i32, i32
  }
  func.func @transform_2(%arg0: i32, %arg1: i32) -> (i32, i32, i32) {
    %c0_i32 = arith.constant 0 : i32
    %c0_i32_0 = arith.constant 0 : i32
    %c0_i32_1 = arith.constant 0 : i32
    return %arg0, %c0_i32, %c0_i32_0 : i32, i32, i32
  }
  func.func @transform_3(%arg0: i32, %arg1: i32) -> (i32, i32, i32) {
    %c0_i32 = arith.constant 0 : i32
    %c0_i32_0 = arith.constant 0 : i32
    %c0_i32_1 = arith.constant 0 : i32
    return %arg0, %c0_i32, %c0_i32_0 : i32, i32, i32
  }
}

</mosaic_0001>

<llo_original>
// kernel: tpu_custom_call.1
$region0: #{tpu_custom_call.1}
  #allocation0 [shape = 'u32[]', space=smem, size = 0x4, offset = 0x4, fixed_abs, tag = 'smem constant byte address 0x4 - core index']
  #allocation1 [shape = 'u32[144,128]{1,0:T(1,128)}', space=vmem, size = 0x12000, scoped, tag = 'internal scratch']
  %s0 = inlined_call_operand.hbm [shape: s32[1,512], index: 0, kind: input, shape index: {}]
  %s1 = inlined_call_operand.hbm [shape: f32[300,128], index: 1, kind: input, shape index: {}]
  %s2 = inlined_call_operand.hbm [shape: f32[2,8,128], index: 2, kind: output, shape index: {0}]
  %s3 = inlined_call_operand.hbm [shape: f32[2,1,128], index: 3, kind: output, shape index: {1}]
  %4 = xla_tuple %s2, %s3
  %s5 = sld [smem:[#allocation0]]
  $region61: #{tpu_custom_call.1} parent=0
    _
  %s7 = ssub.s32 1, %s5
  %s8 = scalar_select 0, %s7, %s5
  $region1: #{tpu_custom_call.1} parent=0
    #allocation2 [shape = 'u8[1024]{0}', space=vmem, size = 0x400, scoped, tag = 'input window, operand 0']
    #allocation3 [shape = 's32[2]{0}', space=sflag, size = 0x8, scoped, tag = 'scoped memory for tpu_custom_call.1']
    #allocation4 [shape = 's32[2]{0}', space=sflag, size = 0x8, scoped, tag = 'scoped memory for tpu_custom_call.1']
    #allocation5 [shape = 'u8[131072]{0}', space=vmem, size = 0x20000, scoped, tag = 'input window, operand 1']
    #allocation6 [shape = 's32[2]{0}', space=sflag, size = 0x8, scoped, tag = 'scoped memory for tpu_custom_call.1']
    #allocation7 [shape = 'u8[8192]{0}', space=vmem, size = 0x2000, scoped, tag = 'output window, operand 0']
    #allocation8 [shape = 'u8[1024]{0}', space=vmem, size = 0x400, scoped, tag = 'output window, operand 1']
    #allocation9 [shape = 's32[2]{0}', space=sflag, size = 0x8, scoped, tag = 'scoped memory for tpu_custom_call.1']
    %9 = vsyncpa [#allocation3], 0
    %s10 = scalar_lea.sflag [#allocation3], 1
    %11 = vsyncpa %s10, 0
    %12 = vsyncpa [#allocation6], 0
    %s13 = scalar_lea.sflag [#allocation6], 1
    %14 = vsyncpa %s13, 0
    %15 = vsyncpa [#allocation4], 0
    %s16 = scalar_lea.sflag [#allocation4], 1
    %17 = vsyncpa %s16, 0
    %18 = vsyncpa [#allocation9], 0
    %s19 = scalar_lea.sflag [#allocation9], 1
    %20 = vsyncpa %s19, 0
    loop: start=0, step=1, limit=6
    $region2: #{tpu_custom_call.1} parent=1 // loop_pre_header
      _
    $region3: #{tpu_custom_call.1} parent=1 // loop_header
      %s22 = sphi 0, %s26
      %p23 = scmp.ge.s32.totalorder %s22, 6
      %s29 = sphi 0, %s41
      %s30 = sphi 0, %s37
      %s31 = sphi 0, %s29
      %s32 = sphi 0, %s30
      %s33 = sphi 0, %s31
      %s34 = sphi 0, %s32
      %s48 = sphi 0, %s50
      %s51 = sphi 0, %s48
      %s52 = sphi 0, %s51
      %s68 = sphi 0, %s52
      %s82 = sphi 0, %s84
      %s85 = sphi 0, %s82
      %s86 = sphi 0, %s85
      %s102 = sphi 0, %s86
      %s108 = sphi 0, %s110
      %s111 = sphi 0, %s108
      %s112 = sphi 0, %s111
      %s128 = sphi 0, %s112
      %s134 = sphi 0, %s136
      %s137 = sphi 0, %s134
      %s138 = sphi 0, %s137
      %s154 = sphi 0, %s138
    $region4: #{tpu_custom_call.1} parent=1 // loop_header_branch
      %25 = sbr.rel (%p23) target = $region8
    $region5: #{tpu_custom_call.1} parent=1 // loop_body
      %s27 = ssub.s32 %s22, 1
      %s28 = ssub.s32 %s22, 2
      %s35 = sadd.s32 1, %s30
      %p36 = scmp.ge.s32.totalorder %s35, 2
      %s37 = scalar_select %p36, 0, %s35
      %s38 = sadd.s32 1, %s29
      %s39 = scalar_select %p36, %s38, %s29
      %p40 = scmp.ge.s32.totalorder %s39, 2
      %s41 = scalar_select %p40, 0, %s39
      %s42 = smul.u32 %s29, 2
      %s43 = sadd.s32 %s42, %s30
      %s44 = smul.u32 %s41, 2
      %s45 = sadd.s32 %s44, %s37
      %s46 = ssub.s32 %s43, %s45
      %p47 = scmp.eq.s32.totalorder %s46, 0
      %s49 = sadd.s32 %s48, 1
      %s50 = scalar_select %p47, %s48, %s49
      %p53 = pneg %p47
      %p54 = scmp.eq.s32.totalorder %s22, 3
      %p55 = por %p53, %p54
      %p56 = scmp.ne.s32.totalorder %s48, %s51
      %p57 = scmp.eq.s32.totalorder %s22, 0
      %p58 = por %p56, %p57
      %p59 = scmp.ne.s32.totalorder %s48, %s51
      %p60 = scmp.eq.s32.totalorder %s27, 3
      %p61 = por %p59, %p60
      %p62 = scmp.ne.s32.totalorder %s51, %s52
      %p63 = scmp.eq.s32.totalorder %s27, 0
      %p64 = por %p62, %p63
      %p65 = scmp.ne.s32.totalorder %s51, %s52
      %p66 = scmp.eq.s32.totalorder %s28, 3
      %p67 = por %p65, %p66
      %p69 = scmp.ne.s32.totalorder %s52, %s68
      %p70 = scmp.eq.s32.totalorder %s28, 0
      %p71 = por %p69, %p70
      %s72 = smul.u32 %s29, 2
      %s73 = sadd.s32 %s72, %s30
      %p74 = scmp.lt.s32.totalorder %s73, 2
      %s75 = scalar_select %p74, %s73, 2
      %s76 = smul.u32 %s41, 2
      %s77 = sadd.s32 %s76, %s37
      %p78 = scmp.lt.s32.totalorder %s77, 2
      %s79 = scalar_select %p78, %s77, 2
      %s80 = ssub.s32 %s75, %s79
      %p81 = scmp.eq.s32.totalorder %s80, 0
      %s83 = sadd.s32 %s82, 1
      %s84 = scalar_select %p81, %s82, %s83
      %p87 = pneg %p81
      %p88 = scmp.eq.s32.totalorder %s22, 3
      %p89 = por %p87, %p88
      %p90 = scmp.ne.s32.totalorder %s82, %s85
      %p91 = scmp.eq.s32.totalorder %s22, 0
      %p92 = por %p90, %p91
      %p93 = scmp.ne.s32.totalorder %s82, %s85
      %p94 = scmp.eq.s32.totalorder %s27, 3
      %p95 = por %p93, %p94
      %p96 = scmp.ne.s32.totalorder %s85, %s86
      %p97 = scmp.eq.s32.totalorder %s27, 0
      %p98 = por %p96, %p97
      %p99 = scmp.ne.s32.totalorder %s85, %s86
      %p100 = scmp.eq.s32.totalorder %s28, 3
      %p101 = por %p99, %p100
      %p103 = scmp.ne.s32.totalorder %s86, %s102
      %p104 = scmp.eq.s32.totalorder %s28, 0
      %p105 = por %p103, %p104
      %s106 = ssub.s32 %s29, %s41
      %p107 = scmp.eq.s32.totalorder %s106, 0
      %s109 = sadd.s32 %s108, 1
      %s110 = scalar_select %p107, %s108, %s109
      %p113 = pneg %p107
      %p114 = scmp.eq.s32.totalorder %s22, 3
      %p115 = por %p113, %p114
      %p116 = scmp.ne.s32.totalorder %s108, %s111
      %p117 = scmp.eq.s32.totalorder %s22, 0
      %p118 = por %p116, %p117
      %p119 = scmp.ne.s32.totalorder %s108, %s111
      %p120 = scmp.eq.s32.totalorder %s27, 3
      %p121 = por %p119, %p120
      %p122 = scmp.ne.s32.totalorder %s111, %s112
      %p123 = scmp.eq.s32.totalorder %s27, 0
      %p124 = por %p122, %p123
      %p125 = scmp.ne.s32.totalorder %s111, %s112
      %p126 = scmp.eq.s32.totalorder %s28, 3
      %p127 = por %p125, %p126
      %p129 = scmp.ne.s32.totalorder %s112, %s128
      %p130 = scmp.eq.s32.totalorder %s28, 0
      %p131 = por %p129, %p130
      %s132 = ssub.s32 %s29, %s41
      %p133 = scmp.eq.s32.totalorder %s132, 0
      %s135 = sadd.s32 %s134, 1
      %s136 = scalar_select %p133, %s134, %s135
      %p139 = pneg %p133
      %p140 = scmp.eq.s32.totalorder %s22, 3
      %p141 = por %p139, %p140
      %p142 = scmp.ne.s32.totalorder %s134, %s137
      %p143 = scmp.eq.s32.totalorder %s22, 0
      %p144 = por %p142, %p143
      %p145 = scmp.ne.s32.totalorder %s134, %s137
      %p146 = scmp.eq.s32.totalorder %s27, 3
      %p147 = por %p145, %p146
      %p148 = scmp.ne.s32.totalorder %s137, %s138
      %p149 = scmp.eq.s32.totalorder %s27, 0
      %p150 = por %p148, %p149
      %p151 = scmp.ne.s32.totalorder %s137, %s138
      %p152 = scmp.eq.s32.totalorder %s28, 3
      %p153 = por %p151, %p152
      %p155 = scmp.ne.s32.totalorder %s138, %s154
      %p156 = scmp.eq.s32.totalorder %s28, 0
      %p157 = por %p155, %p156
      %p158 = scmp.le.s32.totalorder 1, %s22
      %p159 = scmp.lt.s32.totalorder %s22, 5
      %p160 = pnand %p158, %p159
      %p161 = pneg %p160
      // Predicated region
      $region9: #{tpu_custom_call.1} parent=5 // pred_check
        _
      $region10: #{tpu_custom_call.1} parent=5 // pred_check_branch
        %163 = sbr.rel (%p160) target = $region12
      $region11: #{tpu_custom_call.1} parent=5 // pred_region
        %s164 = ssub.s32 %s22, 1
      $region12: #{tpu_custom_call.1} parent=5 // pred_fallthru
        _
      %p165 = scmp.lt.s32.totalorder %s22, 4
      // Predicated region
      $region13: #{tpu_custom_call.1} parent=5 // pred_check
        %p166 = pneg %p165
      $region14: #{tpu_custom_call.1} parent=5 // pred_check_branch
        %168 = sbr.rel (%p166) target = $region16
      $region15: #{tpu_custom_call.1} parent=5 // pred_region
        // Predicated region
        $region17: #{tpu_custom_call.1} parent=15 // pred_check
          %p169 = pneg %p58
        $region18: #{tpu_custom_call.1} parent=15 // pred_check_branch
          %171 = sbr.rel (%p169) target = $region20
        $region19: #{tpu_custom_call.1} parent=15 // pred_region
          %s172 = sand.u32 %s48, 1
          %s173 = scalar_lea.sflag [#allocation3], %s172
          %s174 = sand.u32 %s48, 1
          %s175 = scalar_lea.vmem [#allocation2], %s174
          %s176 = smul.u32 %s29, 2
          %s177 = sadd.s32 %s176, %s30
          %s179 = ssub.s32 16, 16
          %180 = vsyncadd %s173, %s179
          %s181 = smul.addr %s177, 16
          %s182 = scalar_lea.hbm %s0, %s181
          %s184 = sshll.u32 %s175, 4
          %s185 = int_to_ptr.vmem [resolvable:$true] %s184
          %187 = dma.hbm_to_vmem [thread:$0]  %s182, 16, %s185, %s173
        $region20: #{tpu_custom_call.1} parent=15 // pred_fallthru
          _
        // Predicated region
        $region21: #{tpu_custom_call.1} parent=15 // pred_check
          %p188 = pneg %p92
        $region22: #{tpu_custom_call.1} parent=15 // pred_check_branch
          %190 = sbr.rel (%p188) target = $region24
        $region23: #{tpu_custom_call.1} parent=15 // pred_region
          %s191 = sand.u32 %s82, 1
          %s192 = scalar_lea.sflag [#allocation6], %s191
          %s193 = sand.u32 %s82, 1
          %s194 = smul.addr %s193, 128
          %s195 = scalar_lea.vmem [#allocation5], %s194
          %s196 = smul.u32 %s29, 2
          %s197 = sadd.s32 %s196, %s30
          %p198 = scmp.lt.s32.totalorder %s197, 2
          %s199 = scalar_select %p198, %s197, 2
          %s200 = smul.u32 16, %s199
          %s201 = ssub.s32 38, %s200
          %p202 = scmp.lt.s32.totalorder %s201, 16
          %s203 = scalar_select %p202, %s201, 16
          %s204 = smul.u32 128, %s203
          %s206 = ssub.s32 2048, %s204
          %207 = vsyncadd %s192, %s206
          %p208 = scmp.ne.s32.totalorder 0, %s204
          %s209 = smul.addr %s200, 128
          %s210 = scalar_lea.hbm %s1, %s209
          %s211 = smul.u32 8, %s203
          %s212 = sshll.u32 %s195, 4
          %s213 = int_to_ptr.vmem [resolvable:$true] %s212
          %s214 = sshll.u32 %s211, 4
          %218 = dma.hbm_to_vmem [thread:$0]  (%p208), %s210, %s214, %s213, %s192, 128, 128, 8
        $region24: #{tpu_custom_call.1} parent=15 // pred_fallthru
          _
      $region16: #{tpu_custom_call.1} parent=5 // pred_fallthru
        _
      %p219 = scmp.le.s32.totalorder 1, %s22
      %p220 = scmp.lt.s32.totalorder %s22, 5
      %p221 = pnand %p219, %p220
      %p222 = pneg %p221
      // Predicated region
      $region25: #{tpu_custom_call.1} parent=5 // pred_check
        _
      $region26: #{tpu_custom_call.1} parent=5 // pred_check_branch
        %224 = sbr.rel (%p221) target = $region28
      $region27: #{tpu_custom_call.1} parent=5 // pred_region
        %s225 = ssub.s32 %s22, 1
        %s226 = sand.u32 %s51, 1
        %s227 = scalar_lea.sflag [#allocation3], %s226
        %s228 = sand.u32 %s51, 1
        %s229 = scalar_lea.vmem [#allocation2], %s228
        // Predicated region
        $region29: #{tpu_custom_call.1} parent=27 // pred_check
          %p230 = pneg %p64
        $region30: #{tpu_custom_call.1} parent=27 // pred_check_branch
          %232 = sbr.rel (%p230) target = $region32
        $region31: #{tpu_custom_call.1} parent=27 // pred_region
          %233 = dma.done %s227, 16
        $region32: #{tpu_custom_call.1} parent=27 // pred_fallthru
          _
        %s234 = sand.u32 %s85, 1
        %s235 = scalar_lea.sflag [#allocation6], %s234
        %s236 = sand.u32 %s85, 1
        %s237 = smul.addr %s236, 128
        %s238 = scalar_lea.vmem [#allocation5], %s237
        // Predicated region
        $region33: #{tpu_custom_call.1} parent=27 // pred_check
          %p239 = pneg %p98
        $region34: #{tpu_custom_call.1} parent=27 // pred_check_branch
          %241 = sbr.rel (%p239) target = $region36
        $region35: #{tpu_custom_call.1} parent=27 // pred_region
          %242 = dma.done %s235, 2048
        $region36: #{tpu_custom_call.1} parent=27 // pred_fallthru
          _
        %s243 = sand.u32 %s51, 1
        %s244 = scalar_lea.sflag [#allocation3], %s243
        %s245 = sand.u32 %s51, 1
        %s246 = scalar_lea.vmem [#allocation2], %s245
        %p247 = pneg %p64
        %p248 = pneg %p61
        %s249 = sand.u32 %s85, 1
        %s250 = scalar_lea.sflag [#allocation6], %s249
        %s251 = sand.u32 %s85, 1
        %s252 = smul.addr %s251, 128
        %s253 = scalar_lea.vmem [#allocation5], %s252
        %p254 = pneg %p98
        %p255 = pneg %p95
        %p256 = pneg %p124
        %p257 = pneg %p121
        %s258 = sand.u32 %s111, 1
        %s259 = scalar_lea.sflag [#allocation4], %s258
        %s260 = sand.u32 %s111, 1
        %s261 = smul.addr %s260, 8
        %s262 = scalar_lea.vmem [#allocation7], %s261
        %p263 = pneg %p150
        %p264 = pneg %p147
        %s265 = sand.u32 %s137, 1
        %s266 = scalar_lea.sflag [#allocation9], %s265
        %s267 = sand.u32 %s137, 1
        %s268 = scalar_lea.vmem [#allocation8], %s267
        %s269 = smul.u32 %s31, 2
        %s270 = sadd.s32 %s269, %s32
        %s271 = smul.u32 %s31, 2
        %s272 = sadd.s32 %s271, %s32
        %p273 = scmp.lt.s32.totalorder %s272, 2
        %s274 = scalar_select %p273, %s272, 2
        %s275 = smul.u32 16, %s274
        %s276 = ssub.s32 38, %s275
        %p277 = scmp.lt.s32.totalorder %s276, 16
        %s278 = scalar_select %p277, %s276, 16
        %s279 = smul.u32 128, %s278
        %p280 = scmp.eq.s32.totalorder %s32, 0
        // Predicated region
        $region37: #{tpu_custom_call.1} parent=27 // pred_check
          %p281 = pneg %p280
        $region38: #{tpu_custom_call.1} parent=27 // pred_check_branch
          %283 = sbr.rel (%p281) target = $region40
        $region39: #{tpu_custom_call.1} parent=27 // pred_region
          %284 = vst [vmem:[%s262] sm:$0xff] 0.0
          %285 = vst [vmem:[%s268] sm:$0x1] 0.0
        $region40: #{tpu_custom_call.1} parent=27 // pred_fallthru
          _
        %v286 = vld [vmem:[%s229] sm:$0x1]
        %v287 = vld [vmem:[%s238] sm:$0xff]
        %v288 = vld [vmem:[%s238 + $0x8] sm:$0xff]
        %v289 = vld [vmem:[%s238 + $0x10] sm:$0xff]
        %v290 = vld [vmem:[%s238 + $0x18] sm:$0xff]
        %v291 = vld [vmem:[%s238 + $0x20] sm:$0xff]
        %v292 = vld [vmem:[%s238 + $0x28] sm:$0xff]
        %v293 = vld [vmem:[%s238 + $0x30] sm:$0xff]
        %v294 = vld [vmem:[%s238 + $0x38] sm:$0xff]
        %v295 = vld [vmem:[%s238 + $0x40] sm:$0xff]
        %v296 = vld [vmem:[%s238 + $0x48] sm:$0xff]
        %v297 = vld [vmem:[%s238 + $0x50] sm:$0xff]
        %v298 = vld [vmem:[%s238 + $0x58] sm:$0xff]
        %v299 = vld [vmem:[%s238 + $0x60] sm:$0xff]
        %v300 = vld [vmem:[%s238 + $0x68] sm:$0xff]
        %v301 = vld [vmem:[%s238 + $0x70] sm:$0xff]
        %v302 = vld [vmem:[%s238 + $0x78] sm:$0xff]
        %s303 = smul.u32 %s31, 2
        %s304 = sadd.s32 %s303, %s32
        %s305 = smul.u32 %s304, 128
        %s306 = ssub.s32 300, %s305
        %v307 = vlaneseq
        %v308 = vshrl.u32 %v307, 7
        %v309 = vadd.s32 %v308, 8
        %v310 = vadd.s32 %v308, 16
        %v311 = vadd.s32 %v308, 24
        %v312 = vadd.s32 %v308, 32
        %v313 = vadd.s32 %v308, 40
        %v314 = vadd.s32 %v308, 48
        %v315 = vadd.s32 %v308, 56
        %v316 = vadd.s32 %v308, 64
        %v317 = vadd.s32 %v308, 72
        %v318 = vadd.s32 %v308, 80
        %v319 = vadd.s32 %v308, 88
        %v320 = vadd.s32 %v308, 96
        %v321 = vadd.s32 %v308, 104
        %v322 = vadd.s32 %v308, 112
        %v323 = vadd.s32 %v308, 120
        %v324 = vstv %s306
        %vm325 = vcmp.lt.s32.totalorder %v308, %v324
        %vm326 = vcmp.lt.s32.totalorder %v309, %v324
        %vm327 = vcmp.lt.s32.totalorder %v310, %v324
        %vm328 = vcmp.lt.s32.totalorder %v311, %v324
        %vm329 = vcmp.lt.s32.totalorder %v312, %v324
        %vm330 = vcmp.lt.s32.totalorder %v313, %v324
        %vm331 = vcmp.lt.s32.totalorder %v314, %v324
        %vm332 = vcmp.lt.s32.totalorder %v315, %v324
        %vm333 = vcmp.lt.s32.totalorder %v316, %v324
        %vm334 = vcmp.lt.s32.totalorder %v317, %v324
        %vm335 = vcmp.lt.s32.totalorder %v318, %v324
        %vm336 = vcmp.lt.s32.totalorder %v319, %v324
        %vm337 = vcmp.lt.s32.totalorder %v320, %v324
        %vm338 = vcmp.lt.s32.totalorder %v321, %v324
        %vm339 = vcmp.lt.s32.totalorder %v322, %v324
        %vm340 = vcmp.lt.s32.totalorder %v323, %v324
        %v341 = vsel %vm325, %v287, 0.0
        %v342 = vsel %vm326, %v288, 0.0
        %v343 = vsel %vm327, %v289, 0.0
        %v344 = vsel %vm328, %v290, 0.0
        %v345 = vsel %vm329, %v291, 0.0
        %v346 = vsel %vm330, %v292, 0.0
        %v347 = vsel %vm331, %v293, 0.0
        %v348 = vsel %vm332, %v294, 0.0
        %v349 = vsel %vm333, %v295, 0.0
        %v350 = vsel %vm334, %v296, 0.0
        %v351 = vsel %vm335, %v297, 0.0
        %v352 = vsel %vm336, %v298, 0.0
        %v353 = vsel %vm337, %v299, 0.0
        %v354 = vsel %vm338, %v300, 0.0
        %v355 = vsel %vm339, %v301, 0.0
        %v356 = vsel %vm340, %v302, 0.0
        %v357 = vlaneseq
        %v358 = vshrl.u32 %v357, 7
        %v359 = vsub.s32 0, %v358
        %v360 = vrot.slane %v286, %v359
        %vm361 = vcmp.eq.s32.totalorder %v360, %v308
        %v362 = vsel %vm361, 1, 0
        %v363 = vcvt.s32.f32 %v362
        %v364 = vld [vmem:[%s262] sm:$0xff]
        %365 = vmatprep.subr.mxu0 0.0
        %366 = vmatpush1.msra.mxu0 %v341
        %367 = vmatprep.subr.mxu0 0.0
        %368 = vmatpush1.msra.mxu0 %v342
        %369 = vmatprep.subr.mxu0 0.0
        %370 = vmatpush1.msra.mxu0 %v343
        %371 = vmatprep.subr.mxu0 0.0
        %372 = vmatpush1.msra.mxu0 %v344
        %373 = vmatprep.subr.mxu0 0.0
        %374 = vmatpush1.msra.mxu0 %v345
        %375 = vmatprep.subr.mxu0 0.0
        %376 = vmatpush1.msra.mxu0 %v346
        %377 = vmatprep.subr.mxu0 0.0
        %378 = vmatpush1.msra.mxu0 %v347
        %379 = vmatprep.subr.mxu0 0.0
        %380 = vmatpush1.msra.mxu0 %v348
        %381 = vmatprep.subr.mxu0 0.0
        %382 = vmatpush1.msra.mxu0 %v349
        %383 = vmatprep.subr.mxu0 0.0
        %384 = vmatpush1.msra.mxu0 %v350
        %385 = vmatprep.subr.mxu0 0.0
        %386 = vmatpush1.msra.mxu0 %v351
        %387 = vmatprep.subr.mxu0 0.0
        %388 = vmatpush1.msra.mxu0 %v352
        %389 = vmatprep.subr.mxu0 0.0
        %390 = vmatpush1.msra.mxu0 %v353
        %391 = vmatprep.subr.mxu0 0.0
        %392 = vmatpush1.msra.mxu0 %v354
        %393 = vmatprep.subr.mxu0 0.0
        %394 = vmatpush1.msra.mxu0 %v355
        %395 = vmatprep.subr.mxu0 0.0
        %396 = vmatpush1.msra.mxu0 %v356
        %397 = vmatprep.subr.mxu0 0.0
        %398 = vmatpush1.msra.mxu0 0.0
        %399 = vmatprep.subr.mxu0 0.0
        %400 = vmatpush1.msra.mxu0 0.0
        %401 = vmatprep.subr.mxu0 0.0
        %402 = vmatpush1.msra.mxu0 0.0
        %403 = vmatprep.subr.mxu0 0.0
        %404 = vmatpush1.msra.mxu0 0.0
        %405 = vmatprep.subr.mxu0 0.0
        %406 = vmatpush1.msra.mxu0 0.0
        %407 = vmatprep.subr.mxu0 0.0
        %408 = vmatpush1.msra.mxu0 0.0
        %409 = vmatprep.subr.mxu0 0.0
        %410 = vmatpush1.msra.mxu0 0.0
        %411 = vmatprep.subr.mxu0 0.0
        %412 = vmatpush1.msra.mxu0 0.0
        %413 = vmatprep.subr.mxu0 0.0
        %414 = vmatpush1.msra.mxu0 0.0
        %415 = vmatprep.subr.mxu0 0.0
        %416 = vmatpush1.msra.mxu0 0.0
        %417 = vmatprep.subr.mxu0 0.0
        %418 = vmatpush1.msra.mxu0 0.0
        %419 = vmatprep.subr.mxu0 0.0
        %420 = vmatpush1.msra.mxu0 0.0
        %421 = vmatprep.subr.mxu0 0.0
        %422 = vmatpush1.msra.mxu0 0.0
        %423 = vmatprep.subr.mxu0 0.0
        %424 = vmatpush1.msra.mxu0 0.0
        %425 = vmatprep.subr.mxu0 0.0
        %426 = vmatpush1.msra.mxu0 0.0
        %427 = vmatprep.subr.mxu0 0.0
        %428 = vmatpush1.msra.mxu0 0.0
        %429 = vmatprep.mubr.f32.mxu0 0.0
        %430 = vmatmul.mubr.f32.gmra.mrb[0].mxu0 %v363
        %v431 = vpop.f32.mrb[0].mxu0
        %v432 = vadd.f32 0.0, %v431
        %v433 = vpop.f32.mrb[0].mxu0
        %434 = vdwg.mxu0
        %v435 = vadd.f32 %v364, %v432
        %436 = vst [vmem:[%s262] sm:$0xff] %v435
        %v437 = vld [vmem:[%s268] sm:$0x1]
        %v438 = vmul.f32 %v341, %v341
        %v439 = vmul.f32 %v342, %v342
        %v440 = vmul.f32 %v343, %v343
        %v441 = vmul.f32 %v344, %v344
        %v442 = vmul.f32 %v345, %v345
        %v443 = vmul.f32 %v346, %v346
        %v444 = vmul.f32 %v347, %v347
        %v445 = vmul.f32 %v348, %v348
        %v446 = vmul.f32 %v349, %v349
        %v447 = vmul.f32 %v350, %v350
        %v448 = vmul.f32 %v351, %v351
        %v449 = vmul.f32 %v352, %v352
        %v450 = vmul.f32 %v353, %v353
        %v451 = vmul.f32 %v354, %v354
        %v452 = vmul.f32 %v355, %v355
        %v453 = vmul.f32 %v356, %v356
        %v454 = vadd.f32 %v438, %v439
        %v455 = vadd.f32 %v454, %v440
        %v456 = vadd.f32 %v455, %v441
        %v457 = vadd.f32 %v456, %v442
        %v458 = vadd.f32 %v457, %v443
        %v459 = vadd.f32 %v458, %v444
        %v460 = vadd.f32 %v459, %v445
        %v461 = vadd.f32 %v460, %v446
        %v462 = vadd.f32 %v461, %v447
        %v463 = vadd.f32 %v462, %v448
        %v464 = vadd.f32 %v463, %v449
        %v465 = vadd.f32 %v464, %v450
        %v466 = vadd.f32 %v465, %v451
        %v467 = vadd.f32 %v466, %v452
        %v468 = vadd.f32 %v467, %v453
        %v469 = vrot.slane %v468, 4
        %v470 = vadd.f32 %v468, %v469
        %v471 = vrot.slane %v470, 2
        %v472 = vadd.f32 %v470, %v471
        %v473 = vrot.slane %v472, 1
        %v474 = vadd.f32 %v472, %v473
        %v475 = vadd.f32 %v437, %v474
        %476 = vst [vmem:[%s268] sm:$0x1] %v475
        %s477 = sand.u32 %s111, 1
        %s478 = scalar_lea.sflag [#allocation4], %s477
        %s479 = sand.u32 %s111, 1
        %s480 = smul.addr %s479, 8
        %s481 = scalar_lea.vmem [#allocation7], %s480
        %s482 = sand.u32 %s137, 1
        %s483 = scalar_lea.sflag [#allocation9], %s482
        %s484 = sand.u32 %s137, 1
        %s485 = scalar_lea.vmem [#allocation8], %s484
        // Predicated region
        $region41: #{tpu_custom_call.1} parent=27 // pred_check
          %p486 = pneg %p121
        $region42: #{tpu_custom_call.1} parent=27 // pred_check_branch
          %488 = sbr.rel (%p486) target = $region44
        $region43: #{tpu_custom_call.1} parent=27 // pred_region
          %s490 = ssub.s32 128, 128
          %491 = vsyncadd %s478, %s490
          %s492 = smul.addr %s31, 128
          %s493 = scalar_lea.hbm %s2, %s492
          %s495 = sshll.u32 %s481, 4
          %s496 = int_to_ptr.vmem [resolvable:$true] %s495
          %498 = dma.vmem_to_hbm [thread:$0]  %s496, 128, %s493, %s478
        $region44: #{tpu_custom_call.1} parent=27 // pred_fallthru
          _
        // Predicated region
        $region45: #{tpu_custom_call.1} parent=27 // pred_check
          %p499 = pneg %p147
        $region46: #{tpu_custom_call.1} parent=27 // pred_check_branch
          %501 = sbr.rel (%p499) target = $region48
        $region47: #{tpu_custom_call.1} parent=27 // pred_region
          %s503 = ssub.s32 16, 16
          %504 = vsyncadd %s483, %s503
          %s505 = smul.addr %s31, 16
          %s506 = scalar_lea.hbm %s3, %s505
          %s508 = sshll.u32 %s485, 4
          %s509 = int_to_ptr.vmem [resolvable:$true] %s508
          %511 = dma.vmem_to_hbm [thread:$0]  %s509, 16, %s506, %s483
        $region48: #{tpu_custom_call.1} parent=27 // pred_fallthru
          _
      $region28: #{tpu_custom_call.1} parent=5 // pred_fallthru
        _
      %p512 = scmp.le.s32.totalorder 2, %s22
      // Predicated region
      $region49: #{tpu_custom_call.1} parent=5 // pred_check
        %p513 = pneg %p512
      $region50: #{tpu_custom_call.1} parent=5 // pred_check_branch
        %515 = sbr.rel (%p513) target = $region52
      $region51: #{tpu_custom_call.1} parent=5 // pred_region
        %s516 = ssub.s32 %s22, 2
        // Predicated region
        $region53: #{tpu_custom_call.1} parent=51 // pred_check
          %p517 = pneg %p127
        $region54: #{tpu_custom_call.1} parent=51 // pred_check_branch
          %519 = sbr.rel (%p517) target = $region56
        $region55: #{tpu_custom_call.1} parent=51 // pred_region
          %s520 = sand.u32 %s112, 1
          %s521 = scalar_lea.sflag [#allocation4], %s520
          %s522 = sand.u32 %s112, 1
          %s523 = smul.addr %s522, 8
          %s524 = scalar_lea.vmem [#allocation7], %s523
          %525 = dma.done %s521, 128
        $region56: #{tpu_custom_call.1} parent=51 // pred_fallthru
          _
        // Predicated region
        $region57: #{tpu_custom_call.1} parent=51 // pred_check
          %p526 = pneg %p153
        $region58: #{tpu_custom_call.1} parent=51 // pred_check_branch
          %528 = sbr.rel (%p526) target = $region60
        $region59: #{tpu_custom_call.1} parent=51 // pred_region
          %s529 = sand.u32 %s138, 1
          %s530 = scalar_lea.sflag [#allocation9], %s529
          %s531 = sand.u32 %s138, 1
          %s532 = scalar_lea.vmem [#allocation8], %s531
          %533 = dma.done %s530, 16
        $region60: #{tpu_custom_call.1} parent=51 // pred_fallthru
          _
      $region52: #{tpu_custom_call.1} parent=5 // pred_fallthru
        _
    $region6: #{tpu_custom_call.1} parent=1 // loop_footer
      %s26 = sadd.s32 1, %s22
    $region7: #{tpu_custom_call.1} parent=1 // loop_footer_branch
      %21 = sbr.rel target = $region3
    $region8: #{tpu_custom_call.1} parent=1 // loop_exit
      _
    %534 = vsyncpa [#allocation3], 1
    %s535 = scalar_lea.sflag [#allocation3], 1
    %536 = vsyncpa %s535, 1
    %537 = vsyncpa [#allocation6], 1
    %s538 = scalar_lea.sflag [#allocation6], 1
    %539 = vsyncpa %s538, 1
    %540 = vsyncpa [#allocation4], 1
    %s541 = scalar_lea.sflag [#allocation4], 1
    %542 = vsyncpa %s541, 1
    %543 = vsyncpa [#allocation9], 1
    %s544 = scalar_lea.sflag [#allocation9], 1
    %545 = vsyncpa %s544, 1

</llo_original>
